<compile_context>
chip_gen: v7x
topology: tpu7x:2x2x1
jax: 0.10.0
libtpu: 0.0.40
codegen_flags: <defaults>
</compile_context>

<pallas_src>
import jax
import jax.numpy as jnp
from jax.experimental import pallas as pl
from jax.experimental.pallas import tpu as pltpu

_LANES = 128
_SUBLANES = 8
# 2048 rows -> 1 MiB per (R,128) f32 buffer; ~6 MiB payload per grid step and
# ~12 MiB double-buffered VMEM: fits every generation's default scoped VMEM.
_MAX_BLOCK_ROWS = 2048
_MIN_BLOCK_ROWS = 1024


def _round_up(x, m):
    return ((x + m - 1) // m) * m


def _pick_block_rows(n_rows_pad):
    """Rows per block: as large as possible, but keep >=~8 grid steps at huge N."""
    if n_rows_pad <= _MAX_BLOCK_ROWS:
        return n_rows_pad
    r = _round_up(pl.cdiv(n_rows_pad, 8), _SUBLANES)
    return max(_MIN_BLOCK_ROWS, min(_MAX_BLOCK_ROWS, r))


def _flow_body(params_ref, z_ref, slad_ref, fz_ref, ld_ref):
    # params_ref : SMEM f32[K, 8], rows = [w0, w1, u0, u1, b, w.u_hat, slad0, 0]
    # z_ref/fz_ref : VMEM f32[2, R, 128]   (batch packed on sublanes x lanes)
    # slad_ref/ld_ref : VMEM f32[R, 128]
    z0 = z_ref[0]                                  # (R, 128)
    z1 = z_ref[1]                                  # (R, 128)

    if slad_ref is None:
        acc = params_ref[0, 6]                     # scalar running sum (broadcasts)
    else:
        acc = slad_ref[...]                        # (R, 128) running per-sample sum

    num_layers = params_ref.shape[0]
    for k in range(num_layers):                    # static unroll over fused layers
        w0 = params_ref[k, 0]
        w1 = params_ref[k, 1]
        u0 = params_ref[k, 2]
        u1 = params_ref[k, 3]
        b = params_ref[k, 4]
        s = params_ref[k, 5]                       # w . u_hat

        # lin = z @ w.T + b  -> two FMAs per lane (VPU), no cross-lane reduce.
        lin = z0 * w0 + z1 * w1 + b
        t = jnp.tanh(lin)                          # EUP

        # f_z = z + u_hat * tanh(lin)
        z0 = z0 + u0 * t
        z1 = z1 + u1 * t

        # det = 1 + psi @ u_hat.T  collapses to  1 + (1 - t^2) * (w . u_hat)
        det = 1.0 + (1.0 - t * t) * s
        acc = acc + jnp.log(jnp.abs(det) + 1e-06)

    fz_ref[0] = z0
    fz_ref[1] = z1
    ld_ref[...] = acc


def _flow_kernel(params_ref, z_ref, fz_ref, ld_ref):
    _flow_body(params_ref, z_ref, None, fz_ref, ld_ref)


def _flow_kernel_slad(params_ref, z_ref, slad_ref, fz_ref, ld_ref):
    _flow_body(params_ref, z_ref, slad_ref, fz_ref, ld_ref)


def planar_flow(z, us, ws, bs, sum_log_abs_det_jacobians=None, normalize_u=True):
    """Fused stack of K PlanarTransform layers in a single Pallas kernel.

    z: (N, 2) f32.  us, ws: (K, 2) (or (K, 1, 2)).  bs: (K,).
    sum_log_abs_det_jacobians: None, scalar, or (N,) running sum.
    Returns (f_z, sum_log_abs_det_jacobians): (N, 2), (N,).
    """
    z = jnp.asarray(z, jnp.float32)
    N, D = z.shape
    assert D == 2, "PlanarTransform is defined for 2-D latents"

    us = jnp.asarray(us, jnp.float32).reshape(-1, 2)
    ws = jnp.asarray(ws, jnp.float32).reshape(-1, 2)
    bs = jnp.asarray(bs, jnp.float32).reshape(-1)
    num_layers = us.shape[0]
    assert ws.shape[0] == num_layers and bs.shape[0] == num_layers

    # --- tiny scalar parameter glue stays in plain JAX ---
    u_hat = us
    if normalize_u:
        wtu = jnp.sum(ws * us, axis=1)                       # (K,)
        m_wtu = -1.0 + jax.nn.softplus(wtu)                  # stable log1p(exp(.))
        u_hat = us + ((m_wtu - wtu) / jnp.sum(ws * ws, axis=1))[:, None] * ws
    s = jnp.sum(ws * u_hat, axis=1)                          # (K,) w . u_hat

    # Incoming running sum: None / scalar -> fold into params; array -> DMA it.
    slad_arr = None
    slad_scalar = jnp.float32(0.0)
    if sum_log_abs_det_jacobians is not None:
        sl = jnp.asarray(sum_log_abs_det_jacobians, jnp.float32)
        if sl.ndim == 0 or sl.size == 1:
            slad_scalar = sl.reshape(())
        else:
            slad_arr = sl.reshape(-1)

    zeros_k = jnp.zeros((num_layers,), jnp.float32)
    slad_col = zeros_k.at[0].set(slad_scalar)                # added once, layer 0
    params = jnp.stack([ws[:, 0], ws[:, 1], u_hat[:, 0], u_hat[:, 1],
                        bs, s, slad_col, zeros_k], axis=1)   # f32[K, 8] -> SMEM
    # NOTE: the table already lives in SMEM for the whole grid; passing it via
    # PrefetchScalarGridSpec(num_scalar_prefetch=1) would be equivalent.

    # --- packed SoA layout: batch on sublanes x lanes; one transpose at the
    #     ends of the whole (possibly multi-layer) flow ---
    n_rows = pl.cdiv(N, _LANES)
    n_rows_pad = _round_up(n_rows, _SUBLANES)
    n_pad = n_rows_pad * _LANES

    z_soa = z.T                                              # (2, N)
    if n_pad != N:
        z_soa = jnp.pad(z_soa, ((0, 0), (0, n_pad - N)))
    z_soa = z_soa.reshape(2, n_rows_pad, _LANES)

    block_rows = _pick_block_rows(n_rows_pad)
    grid = (pl.cdiv(n_rows_pad, block_rows),)                # partial last block is masked

    smem_spec = pl.BlockSpec(memory_space=pltpu.MemorySpace.SMEM)
    z_spec = pl.BlockSpec((2, block_rows, _LANES), lambda i: (0, i, 0))
    ld_spec = pl.BlockSpec((block_rows, _LANES), lambda i: (i, 0))

    out_shape = (jax.ShapeDtypeStruct((2, n_rows_pad, _LANES), jnp.float32),
                 jax.ShapeDtypeStruct((n_rows_pad, _LANES), jnp.float32))
    compiler_params = pltpu.CompilerParams(dimension_semantics=("parallel",))

    if slad_arr is None:
        fz_soa, logdet = pl.pallas_call(
            _flow_kernel,
            out_shape=out_shape,
            grid_spec=pltpu.PrefetchScalarGridSpec(
                num_scalar_prefetch=0,
                grid=grid,
                in_specs=[smem_spec, z_spec],
                out_specs=[z_spec, ld_spec],
            ),
            compiler_params=compiler_params,
        )(params, z_soa)
    else:
        slad_soa = slad_arr
        if n_pad != N:
            slad_soa = jnp.pad(slad_soa, (0, n_pad - N))
        slad_soa = slad_soa.reshape(n_rows_pad, _LANES)
        fz_soa, logdet = pl.pallas_call(
            _flow_kernel_slad,
            out_shape=out_shape,
            grid_spec=pltpu.PrefetchScalarGridSpec(
                num_scalar_prefetch=0,
                grid=grid,
                in_specs=[smem_spec, z_spec, ld_spec],
                out_specs=[z_spec, ld_spec],
            ),
            # flat operand indices: params=0, z=1, slad=2 -> alias slad to the
            # log-det output (output index 1): reuse the running-sum buffer.
            input_output_aliases={2: 1},
            compiler_params=compiler_params,
        )(params, z_soa, slad_soa)

    f_z = fz_soa.reshape(2, n_pad)[:, :N].T                  # one transpose at exit
    slad_out = logdet.reshape(n_pad)[:N]
    return f_z, slad_out


def planar_transform(z, u, w, b, sum_log_abs_det_jacobians=None, normalize_u=True):
    """JAX/Pallas equivalent of PlanarTransform.forward (single layer, K=1)."""
    return planar_flow(z, u, w, b, sum_log_abs_det_jacobians, normalize_u)


def _reference_layer(z, u, w, b, normalize_u=True):
    """Pure-JAX transcription of the PyTorch forward (one layer)."""
    u_hat = u
    if normalize_u:
        wtu = jnp.squeeze(w @ u.T)
        m_wtu = -1.0 + jnp.log1p(jnp.exp(wtu))
        u_hat = u + (m_wtu - wtu) * w / (w @ w.T)
    lin = z @ w.T + b
    f_z = z + u_hat * jnp.tanh(lin)
    psi = (1.0 - jnp.tanh(lin) ** 2) @ w
    det = 1.0 + psi @ u_hat.T
    log_abs_det = jnp.squeeze(jnp.log(jnp.abs(det) + 1e-06))
    return f_z, log_abs_det


if __name__ == "__main__":
    key = jax.random.PRNGKey(0)
    k_u, k_w, k_z, k_s, k_flow = jax.random.split(key, 5)

    init_sigma = 0.01
    u = init_sigma * jax.random.normal(k_u, (1, 2), dtype=jnp.float32)
    w = init_sigma * jax.random.normal(k_w, (1, 2), dtype=jnp.float32)
    b = jnp.zeros((1,), dtype=jnp.float32)

    N = 256
    z = jax.random.normal(k_z, (N, 2), dtype=jnp.float32)

    # Case 1: plain tensor input -> incoming running sum is 0.
    f_z, slad = planar_transform(z, u, w, b)
    f_z = jax.block_until_ready(f_z)
    slad = jax.block_until_ready(slad)
    f_ref, l_ref = _reference_layer(z, u, w, b)
    assert f_z.shape == (N, 2) and slad.shape == (N,)
    assert jnp.allclose(f_z, f_ref, atol=1e-5, rtol=1e-5)
    assert jnp.allclose(slad, l_ref, atol=1e-5, rtol=1e-5)

    # Case 2: tuple-style input (z, running per-sample sum); the slad buffer is
    # aliased with the log-det output inside the kernel call.
    slad_in = jax.random.normal(k_s, (N,), dtype=jnp.float32)
    f_z2, slad2 = planar_transform(z, u, w, b, sum_log_abs_det_jacobians=slad_in)
    f_z2 = jax.block_until_ready(f_z2)
    slad2 = jax.block_until_ready(slad2)
    assert jnp.allclose(f_z2, f_ref, atol=1e-5, rtol=1e-5)
    assert jnp.allclose(slad2, slad_in + l_ref, atol=1e-5, rtol=1e-5)

    # Case 3: fused stack of K=3 planar layers in one kernel (SMEM param table).
    K = 3
    ku, kw = jax.random.split(k_flow)
    us = init_sigma * jax.random.normal(ku, (K, 2), dtype=jnp.float32)
    ws = init_sigma * jax.random.normal(kw, (K, 2), dtype=jnp.float32)
    bs = jnp.zeros((K,), dtype=jnp.float32)
    f3, l3 = planar_flow(z, us, ws, bs)
    f3 = jax.block_until_ready(f3)
    l3 = jax.block_until_ready(l3)
    z_seq = z
    l_seq = jnp.zeros((N,), jnp.float32)
    for k in range(K):
        z_seq, lk = _reference_layer(z_seq, us[k:k + 1], ws[k:k + 1], bs[k:k + 1])
        l_seq = l_seq + lk
    assert jnp.allclose(f3, z_seq, atol=1e-5, rtol=1e-5)
    assert jnp.allclose(l3, l_seq, atol=1e-5, rtol=1e-5)

    print("KERNEL_OK")
</pallas_src>

<mosaic_0001>
module attributes {stable_mosaic.version = 11 : i64} {
  func.func @_flow_kernel(%arg0: i32, %arg1: memref<1x8xf32, #tpu.memory_space<smem>>, %arg2: memref<2x8x128xf32, #tpu.memory_space<vmem>>, %arg3: memref<2x8x128xf32, #tpu.memory_space<vmem>>, %arg4: memref<8x128xf32, #tpu.memory_space<vmem>>) attributes {dimension_semantics = [#tpu.dimension_semantics<parallel>], iteration_bounds = array<i64: 1>, scalar_prefetch = 0 : i64, scratch_operands = 0 : i64, tpu.core_type = #tpu.core_type<tc>, window_params = [{transform_indices = @transform_0, window_bounds = array<i64: 1, 8>}, {transform_indices = @transform_1, window_bounds = array<i64: 2, 8, 128>}, {transform_indices = @transform_2, window_bounds = array<i64: 2, 8, 128>}, {transform_indices = @transform_3, window_bounds = array<i64: 8, 128>}]} {
    %c0 = arith.constant 0 : index
    %c0_0 = arith.constant 0 : index
    %c0_1 = arith.constant 0 : index
    %0 = vector.load %arg2[%c0, %c0_0, %c0_1] : memref<2x8x128xf32, #tpu.memory_space<vmem>>, vector<1x8x128xf32>
    %1 = vector.shape_cast %0 : vector<1x8x128xf32> to vector<8x128xf32>
    %c1 = arith.constant 1 : index
    %c0_2 = arith.constant 0 : index
    %c0_3 = arith.constant 0 : index
    %2 = vector.load %arg2[%c1, %c0_2, %c0_3] : memref<2x8x128xf32, #tpu.memory_space<vmem>>, vector<1x8x128xf32>
    %3 = vector.shape_cast %2 : vector<1x8x128xf32> to vector<8x128xf32>
    %c0_4 = arith.constant 0 : index
    %c6 = arith.constant 6 : index
    %4 = memref.load %arg1[%c0_4, %c6] : memref<1x8xf32, #tpu.memory_space<smem>>
    %c0_5 = arith.constant 0 : index
    %c0_6 = arith.constant 0 : index
    %5 = memref.load %arg1[%c0_5, %c0_6] : memref<1x8xf32, #tpu.memory_space<smem>>
    %c0_7 = arith.constant 0 : index
    %c1_8 = arith.constant 1 : index
    %6 = memref.load %arg1[%c0_7, %c1_8] : memref<1x8xf32, #tpu.memory_space<smem>>
    %c0_9 = arith.constant 0 : index
    %c2 = arith.constant 2 : index
    %7 = memref.load %arg1[%c0_9, %c2] : memref<1x8xf32, #tpu.memory_space<smem>>
    %c0_10 = arith.constant 0 : index
    %c3 = arith.constant 3 : index
    %8 = memref.load %arg1[%c0_10, %c3] : memref<1x8xf32, #tpu.memory_space<smem>>
    %c0_11 = arith.constant 0 : index
    %c4 = arith.constant 4 : index
    %9 = memref.load %arg1[%c0_11, %c4] : memref<1x8xf32, #tpu.memory_space<smem>>
    %c0_12 = arith.constant 0 : index
    %c5 = arith.constant 5 : index
    %10 = memref.load %arg1[%c0_12, %c5] : memref<1x8xf32, #tpu.memory_space<smem>>
    %11 = vector.broadcast %5 : f32 to vector<8x128xf32>
    %12 = arith.mulf %1, %11 : vector<8x128xf32>
    %13 = vector.broadcast %6 : f32 to vector<8x128xf32>
    %14 = arith.mulf %3, %13 : vector<8x128xf32>
    %15 = arith.addf %12, %14 : vector<8x128xf32>
    %16 = vector.broadcast %9 : f32 to vector<8x128xf32>
    %17 = arith.addf %15, %16 : vector<8x128xf32>
    %18 = math.tanh %17 : vector<8x128xf32>
    %19 = vector.broadcast %7 : f32 to vector<8x128xf32>
    %20 = arith.mulf %19, %18 : vector<8x128xf32>
    %21 = arith.addf %1, %20 : vector<8x128xf32>
    %22 = vector.broadcast %8 : f32 to vector<8x128xf32>
    %23 = arith.mulf %22, %18 : vector<8x128xf32>
    %24 = arith.addf %3, %23 : vector<8x128xf32>
    %25 = arith.mulf %18, %18 : vector<8x128xf32>
    %cst = arith.constant 1.000000e+00 : f32
    %26 = vector.broadcast %cst : f32 to vector<8x128xf32>
    %27 = arith.subf %26, %25 : vector<8x128xf32>
    %28 = vector.broadcast %10 : f32 to vector<8x128xf32>
    %29 = arith.mulf %27, %28 : vector<8x128xf32>
    %cst_13 = arith.constant 1.000000e+00 : f32
    %30 = vector.broadcast %cst_13 : f32 to vector<8x128xf32>
    %31 = arith.addf %30, %29 : vector<8x128xf32>
    %32 = math.absf %31 : vector<8x128xf32>
    %cst_14 = arith.constant 9.99999997E-7 : f32
    %33 = vector.broadcast %cst_14 : f32 to vector<8x128xf32>
    %34 = arith.addf %32, %33 : vector<8x128xf32>
    %35 = math.log %34 : vector<8x128xf32>
    %36 = vector.broadcast %4 : f32 to vector<8x128xf32>
    %37 = arith.addf %36, %35 : vector<8x128xf32>
    %c0_15 = arith.constant 0 : index
    %c0_16 = arith.constant 0 : index
    %c0_17 = arith.constant 0 : index
    %38 = vector.load %arg3[%c0_15, %c0_16, %c0_17] : memref<2x8x128xf32, #tpu.memory_space<vmem>>, vector<1x8x128xf32>
    %39 = vector.shape_cast %38 : vector<1x8x128xf32> to vector<8x128xf32>
    %40 = vector.shape_cast %21 : vector<8x128xf32> to vector<1x8x128xf32>
    tpu.vector_store %arg3[%c0_15, %c0_16, %c0_17], %40 {strides = array<i32>} : memref<2x8x128xf32, #tpu.memory_space<vmem>>, vector<1x8x128xf32>,
    %c1_18 = arith.constant 1 : index
    %c0_19 = arith.constant 0 : index
    %c0_20 = arith.constant 0 : index
    %41 = vector.load %arg3[%c1_18, %c0_19, %c0_20] : memref<2x8x128xf32, #tpu.memory_space<vmem>>, vector<1x8x128xf32>
    %42 = vector.shape_cast %41 : vector<1x8x128xf32> to vector<8x128xf32>
    %43 = vector.shape_cast %24 : vector<8x128xf32> to vector<1x8x128xf32>
    tpu.vector_store %arg3[%c1_18, %c0_19, %c0_20], %43 {strides = array<i32>} : memref<2x8x128xf32, #tpu.memory_space<vmem>>, vector<1x8x128xf32>,
    %c0_21 = arith.constant 0 : index
    %c0_22 = arith.constant 0 : index
    %44 = vector.load %arg4[%c0_21, %c0_22] : memref<8x128xf32, #tpu.memory_space<vmem>>, vector<8x128xf32>
    tpu.vector_store %arg4[%c0_21, %c0_22], %37 {strides = array<i32>} : memref<8x128xf32, #tpu.memory_space<vmem>>, vector<8x128xf32>,
    return
  }
  func.func @transform_0(%arg0: i32) -> (i32, i32) {
    %c0_i32 = arith.constant 0 : i32
    %c0_i32_0 = arith.constant 0 : i32
    %c0_i32_1 = arith.constant 0 : i32
    return %c0_i32, %c0_i32_0 : i32, i32
  }
  func.func @transform_1(%arg0: i32) -> (i32, i32, i32) {
    %c0_i32 = arith.constant 0 : i32
    %c0_i32_0 = arith.constant 0 : i32
    %c0_i32_1 = arith.constant 0 : i32
    return %c0_i32, %arg0, %c0_i32_0 : i32, i32, i32
  }
  func.func @transform_2(%arg0: i32) -> (i32, i32, i32) {
    %c0_i32 = arith.constant 0 : i32
    %c0_i32_0 = arith.constant 0 : i32
    %c0_i32_1 = arith.constant 0 : i32
    return %c0_i32, %arg0, %c0_i32_0 : i32, i32, i32
  }
  func.func @transform_3(%arg0: i32) -> (i32, i32) {
    %c0_i32 = arith.constant 0 : i32
    %c0_i32_0 = arith.constant 0 : i32
    return %arg0, %c0_i32 : i32, i32
  }
}

</mosaic_0001>

<llo_original>
// kernel: tpu_custom_call.1
$region0: #{tpu_custom_call.1}
  #allocation0 [shape = 'u32[]', space=smem, size = 0x4, offset = 0x4, fixed_abs, tag = 'smem constant byte address 0x4 - core index']
  #allocation1 [shape = 'u32[144,128]{1,0:T(1,128)}', space=vmem, size = 0x12000, scoped, tag = 'internal scratch']
  %s0 = inlined_call_operand.hbm [shape: f32[1,8], index: 0, kind: input, shape index: {}]
  %s1 = inlined_call_operand.hbm [shape: f32[2,8,128], index: 1, kind: input, shape index: {}]
  %s2 = inlined_call_operand.hbm [shape: f32[2,8,128], index: 2, kind: output, shape index: {0}]
  %s3 = inlined_call_operand.hbm [shape: f32[8,128], index: 3, kind: output, shape index: {1}]
  %4 = xla_tuple %s2, %s3
  %s5 = sld [smem:[#allocation0]]
  $region34: #{tpu_custom_call.1} parent=0
    _
  %s7 = ssub.s32 1, %s5
  %s8 = scalar_select 0, %s7, %s5
  $region1: #{tpu_custom_call.1} parent=0
    #allocation2 [shape = 'u8[512]{0}', space=smem, size = 0x200, scoped, tag = 'input window, operand 0, single buffered']
    #allocation3 [shape = 's32[1]{0}', space=sflag, size = 0x4, scoped, tag = 'scoped memory for tpu_custom_call.1']
    #allocation4 [shape = 's32[1]{0}', space=sflag, size = 0x4, scoped, tag = 'scoped memory for tpu_custom_call.1']
    #allocation5 [shape = 's32[1]{0}', space=sflag, size = 0x4, scoped, tag = 'scoped memory for tpu_custom_call.1']
    #allocation6 [shape = 'u8[8192]{0}', space=vmem, size = 0x2000, scoped, tag = 'input window, operand 1, single buffered']
    #allocation7 [shape = 'u8[8192]{0}', space=vmem, size = 0x2000, scoped, tag = 'output window, operand 0, single buffered']
    #allocation8 [shape = 'u8[4096]{0}', space=vmem, size = 0x1000, scoped, tag = 'output window, operand 1, single buffered']
    #allocation9 [shape = 's32[1]{0}', space=sflag, size = 0x4, scoped, tag = 'scoped memory for tpu_custom_call.1']
    %9 = vsyncpa [#allocation5], 0
    %10 = vsyncpa [#allocation3], 0
    %11 = vsyncpa [#allocation4], 0
    %12 = vsyncpa [#allocation9], 0
    // Predicated region
    $region2: #{tpu_custom_call.1} parent=1 // pred_check
      _
    $region3: #{tpu_custom_call.1} parent=1 // pred_check_branch
      %14 = sbr.rel (0) target = $region5
    $region4: #{tpu_custom_call.1} parent=1 // pred_region
      %s16 = ssub.s32 16, 16
      %17 = vsyncadd [#allocation5], %s16
      %20 = dma.hbm_to_smem %s0, 16, [#allocation2], [#allocation5]
    $region5: #{tpu_custom_call.1} parent=1 // pred_fallthru
      _
    // Predicated region
    $region6: #{tpu_custom_call.1} parent=1 // pred_check
      _
    $region7: #{tpu_custom_call.1} parent=1 // pred_check_branch
      %22 = sbr.rel (0) target = $region9
    $region8: #{tpu_custom_call.1} parent=1 // pred_region
      %s24 = ssub.s32 256, 256
      %25 = vsyncadd [#allocation3], %s24
      %s26 = sshll.u32 [#allocation6], 4
      %s27 = int_to_ptr.vmem [resolvable:$true] %s26
      %32 = dma.hbm_to_vmem [thread:$0]  %s1, 256, %s27, [#allocation3], 128, 128, 8
    $region9: #{tpu_custom_call.1} parent=1 // pred_fallthru
      _
    // Predicated region
    $region10: #{tpu_custom_call.1} parent=1 // pred_check
      _
    $region11: #{tpu_custom_call.1} parent=1 // pred_check_branch
      %34 = sbr.rel (0) target = $region13
    $region12: #{tpu_custom_call.1} parent=1 // pred_region
      %35 = dma.done [#allocation5], 16
    $region13: #{tpu_custom_call.1} parent=1 // pred_fallthru
      _
    // Predicated region
    $region14: #{tpu_custom_call.1} parent=1 // pred_check
      _
    $region15: #{tpu_custom_call.1} parent=1 // pred_check_branch
      %37 = sbr.rel (0) target = $region17
    $region16: #{tpu_custom_call.1} parent=1 // pred_region
      %38 = dma.done [#allocation3], 256
    $region17: #{tpu_custom_call.1} parent=1 // pred_fallthru
      _
    %39 = sfence
    %v40 = vld [vmem:[#allocation6] sm:$0xff]
    %s41 = scalar_lea.vmem [#allocation6], 8
    %v42 = vld [vmem:[%s41] sm:$0xff]
    %s43 = sld [smem:[#allocation2 + $0x6]]
    %s44 = sld [smem:[#allocation2]]
    %s45 = sld [smem:[#allocation2 + $0x1]]
    %s46 = sld [smem:[#allocation2 + $0x2]]
    %s47 = sld [smem:[#allocation2 + $0x3]]
    %s48 = sld [smem:[#allocation2 + $0x4]]
    %s49 = sld [smem:[#allocation2 + $0x5]]
    %v50 = vstv %s44
    %v51 = vmul.f32 %v40, %v50
    %v52 = vstv %s45
    %v53 = vmul.f32 %v42, %v52
    %v54 = vadd.f32 %v51, %v53
    %v55 = vstv %s48
    %v56 = vadd.f32 %v54, %v55
    %v57 = vtanh.pop %v56
    %v58 = vstv %s46
    %v59 = vmul.f32 %v58, %v57
    %v60 = vadd.f32 %v40, %v59
    %v61 = vstv %s47
    %v62 = vmul.f32 %v61, %v57
    %v63 = vadd.f32 %v42, %v62
    %v64 = vmul.f32 %v57, %v57
    %v65 = vsub.f32 1.0, %v64
    %v66 = vstv %s49
    %v67 = vmul.f32 %v65, %v66
    %v68 = vadd.f32 %v67, 1.0
    %v69 = vand.u32 2147483647, %v68
    %v70 = vadd.f32 %v69, 1e-06
    %v71 = vlog2.pop %v70
    %v72 = vmul.f32 %v71, 0.6931472
    %v73 = vstv %s43
    %v74 = vadd.f32 %v73, %v72
    %75 = vst [vmem:[#allocation7] sm:$0xff] %v60
    %s76 = scalar_lea.vmem [#allocation7], 8
    %77 = vst [vmem:[%s76] sm:$0xff] %v63
    %78 = vst [vmem:[#allocation8] sm:$0xff] %v74
    // Predicated region
    $region18: #{tpu_custom_call.1} parent=1 // pred_check
      _
    $region19: #{tpu_custom_call.1} parent=1 // pred_check_branch
      %80 = sbr.rel (0) target = $region21
    $region20: #{tpu_custom_call.1} parent=1 // pred_region
      %s82 = ssub.s32 256, 256
      %83 = vsyncadd [#allocation4], %s82
      %s84 = sshll.u32 [#allocation7], 4
      %s85 = int_to_ptr.vmem [resolvable:$true] %s84
      %90 = dma.vmem_to_hbm [thread:$0]  %s85, 256, %s2, [#allocation4], 128, 128, 8
    $region21: #{tpu_custom_call.1} parent=1 // pred_fallthru
      _
    // Predicated region
    $region22: #{tpu_custom_call.1} parent=1 // pred_check
      _
    $region23: #{tpu_custom_call.1} parent=1 // pred_check_branch
      %92 = sbr.rel (0) target = $region25
    $region24: #{tpu_custom_call.1} parent=1 // pred_region
      %s94 = ssub.s32 128, 128
      %95 = vsyncadd [#allocation9], %s94
      %s97 = sshll.u32 [#allocation8], 4
      %s98 = int_to_ptr.vmem [resolvable:$true] %s97
      %100 = dma.vmem_to_hbm [thread:$0]  %s98, 128, %s3, [#allocation9]
    $region25: #{tpu_custom_call.1} parent=1 // pred_fallthru
      _
    // Predicated region
    $region26: #{tpu_custom_call.1} parent=1 // pred_check
      _
    $region27: #{tpu_custom_call.1} parent=1 // pred_check_branch
      %102 = sbr.rel (0) target = $region29
    $region28: #{tpu_custom_call.1} parent=1 // pred_region
      %103 = dma.done [#allocation4], 256
    $region29: #{tpu_custom_call.1} parent=1 // pred_fallthru
      _
    // Predicated region
    $region30: #{tpu_custom_call.1} parent=1 // pred_check
      _
    $region31: #{tpu_custom_call.1} parent=1 // pred_check_branch
      %105 = sbr.rel (0) target = $region33
    $region32: #{tpu_custom_call.1} parent=1 // pred_region
      %106 = dma.done [#allocation9], 128
    $region33: #{tpu_custom_call.1} parent=1 // pred_fallthru
      _
    %107 = vsyncpa [#allocation3], 1
    %108 = vsyncpa [#allocation4], 1
    %109 = vsyncpa [#allocation9], 1
    %110 = vsyncpa [#allocation5], 1

</llo_original>
